<compile_context>
chip_gen: v7x
topology: tpu7x:2x2x1
jax: 0.10.0
libtpu: 0.0.40
codegen_flags: <defaults>
</compile_context>

<pallas_src>
import functools

import jax
import jax.numpy as jnp
from jax.experimental import pallas as pl
from jax.experimental.pallas import tpu as pltpu

H1, H2, N_OUT = 128, 64, 2
N_OUT_PAD = 128  # lane-dense (multiple of 128) output width


def _mlp_kernel(x_ref, w1_ref, b1_ref, w2_ref, b2_ref, w3_ref, b3_ref, o_ref):
    # Layer 1: (TB, D)bf16 @ (D, 128)bf16 -> f32, bias + ReLU in f32.
    h1 = jnp.dot(x_ref[...], w1_ref[...], preferred_element_type=jnp.float32)
    h1 = jnp.maximum(h1 + b1_ref[...], 0.0)
    # Layer 2: (TB, 128) @ (128, 64) -> f32.
    h2 = jnp.dot(h1.astype(jnp.bfloat16), w2_ref[...],
                 preferred_element_type=jnp.float32)
    h2 = jnp.maximum(h2 + b2_ref[...], 0.0)
    # Layer 3: (TB, 64) @ (64, 128-padded) -> f32; cols >= 2 are zeros.
    h3 = jnp.dot(h2.astype(jnp.bfloat16), w3_ref[...],
                 preferred_element_type=jnp.float32)
    o_ref[...] = (h3 + b3_ref[...]).astype(o_ref.dtype)


def _round_up(v, m):
    return ((v + m - 1) // m) * m


@functools.partial(jax.jit, static_argnames=("block_b",))
def parkinsons_net_forward(x, params, block_b=1024):
    """Fused ParkinsonsNet forward.

    x: (B, input_dim) float32
    params: dict of f32 weights stored transposed vs PyTorch:
            w1 (D,128), b1 (1,128), w2 (128,64), b2 (1,64), w3 (64,2), b3 (1,2)
    returns: (B, 2) float32
    """
    B, D = x.shape

    # Batch tile: largest tile up to block_b, 8-row (sublane) aligned.
    tb = min(block_b, _round_up(B, 8))
    b_pad = _round_up(B, tb)
    nb = b_pad // tb

    # bf16 at the HBM boundary (halves the dominant x stream); zero-pad the
    # ragged batch tail so every grid step is a full tile.
    x_bf = x.astype(jnp.bfloat16)
    if b_pad != B:
        x_bf = jnp.pad(x_bf, ((0, b_pad - B), (0, 0)))

    w1 = params["w1"].astype(jnp.bfloat16)
    w2 = params["w2"].astype(jnp.bfloat16)
    w3 = jnp.pad(params["w3"], ((0, 0), (0, N_OUT_PAD - N_OUT))).astype(jnp.bfloat16)
    b1 = params["b1"].astype(jnp.float32)
    b2 = params["b2"].astype(jnp.float32)
    b3 = jnp.pad(params["b3"], ((0, 0), (0, N_OUT_PAD - N_OUT))).astype(jnp.float32)

    # Weights/biases: full-array blocks, constant index_map -> VMEM-resident.
    resident = lambda shape: pl.BlockSpec(shape, lambda i: (0, 0))

    out_padded = pl.pallas_call(
        _mlp_kernel,
        out_shape=jax.ShapeDtypeStruct((b_pad, N_OUT_PAD), jnp.float32),
        grid_spec=pl.GridSpec(
            grid=(nb,),
            in_specs=[
                pl.BlockSpec((tb, D), lambda i: (i, 0)),   # x: tiled over batch
                resident(w1.shape), resident(b1.shape),
                resident(w2.shape), resident(b2.shape),
                resident(w3.shape), resident(b3.shape),
            ],
            out_specs=pl.BlockSpec((tb, N_OUT_PAD), lambda i: (i, 0)),
        ),
        compiler_params=pltpu.CompilerParams(
            dimension_semantics=("parallel",),     # megacore-shardable on v7x
            vmem_limit_bytes=32 * 1024 * 1024,     # headroom on v5e (16 MiB default)
        ),
    )(x_bf, w1, b1, w2, b2, w3, b3)

    # Drop the padded rows and the zero-padded output lanes.
    return out_padded[:B, :N_OUT]


def init_params(key, input_dim):
    """Deterministic init mimicking nn.Linear's U(-1/sqrt(fan_in), 1/sqrt(fan_in))."""
    ks = jax.random.split(key, 6)

    def linear(kw, kb, fan_in, fan_out):
        bound = 1.0 / jnp.sqrt(fan_in)
        w = jax.random.uniform(kw, (fan_in, fan_out), jnp.float32, -bound, bound)
        b = jax.random.uniform(kb, (1, fan_out), jnp.float32, -bound, bound)
        return w, b

    w1, b1 = linear(ks[0], ks[1], input_dim, H1)
    w2, b2 = linear(ks[2], ks[3], H1, H2)
    w3, b3 = linear(ks[4], ks[5], H2, N_OUT)
    return {"w1": w1, "b1": b1, "w2": w2, "b2": b2, "w3": w3, "b3": b3}


def reference_forward(x, p):
    h1 = jnp.maximum(x @ p["w1"] + p["b1"], 0.0)
    h2 = jnp.maximum(h1 @ p["w2"] + p["b2"], 0.0)
    return h2 @ p["w3"] + p["b3"]


if __name__ == "__main__":
    key = jax.random.PRNGKey(0)
    k_param, k_x1, k_x2 = jax.random.split(key, 3)

    batch, input_dim = 8, 32
    params = init_params(k_param, input_dim)
    x = jax.random.normal(k_x1, (batch, input_dim), jnp.float32)

    out = jax.block_until_ready(parkinsons_net_forward(x, params))
    ref = reference_forward(x, params)
    assert out.shape == (batch, N_OUT)
    # bf16 inputs/weights with f32 accumulation vs pure-f32 reference.
    assert jnp.allclose(out, ref, atol=5e-2, rtol=5e-2), "mismatch vs JAX reference"

    # Exercise the multi-tile + ragged-batch path (B not a multiple of TB).
    x2 = jax.random.normal(k_x2, (300, input_dim), jnp.float32)
    out2 = jax.block_until_ready(parkinsons_net_forward(x2, params, block_b=128))
    ref2 = reference_forward(x2, params)
    assert out2.shape == (300, N_OUT)
    assert jnp.allclose(out2, ref2, atol=5e-2, rtol=5e-2), "mismatch (tiled path)"

    print("KERNEL_OK")
</pallas_src>

<mosaic_0001>
module attributes {stable_mosaic.version = 11 : i64} {
  func.func @_mlp_kernel(%arg0: i32, %arg1: memref<8x32xbf16, #tpu.memory_space<vmem>>, %arg2: memref<32x128xbf16, #tpu.memory_space<vmem>>, %arg3: memref<1x128xf32, #tpu.memory_space<vmem>>, %arg4: memref<128x64xbf16, #tpu.memory_space<vmem>>, %arg5: memref<1x64xf32, #tpu.memory_space<vmem>>, %arg6: memref<64x128xbf16, #tpu.memory_space<vmem>>, %arg7: memref<1x128xf32, #tpu.memory_space<vmem>>, %arg8: memref<8x128xf32, #tpu.memory_space<vmem>>) attributes {dimension_semantics = [#tpu.dimension_semantics<parallel>], iteration_bounds = array<i64: 1>, scalar_prefetch = 0 : i64, scratch_operands = 0 : i64, tpu.core_type = #tpu.core_type<tc>, window_params = [{transform_indices = @transform_0, window_bounds = array<i64: 8, 32>}, {pipeline_mode = #tpu.pipeline_mode<synchronous>, transform_indices = @transform_1, window_bounds = array<i64: 32, 128>}, {pipeline_mode = #tpu.pipeline_mode<synchronous>, transform_indices = @transform_2, window_bounds = array<i64: 1, 128>}, {pipeline_mode = #tpu.pipeline_mode<synchronous>, transform_indices = @transform_3, window_bounds = array<i64: 128, 64>}, {pipeline_mode = #tpu.pipeline_mode<synchronous>, transform_indices = @transform_4, window_bounds = array<i64: 1, 64>}, {pipeline_mode = #tpu.pipeline_mode<synchronous>, transform_indices = @transform_5, window_bounds = array<i64: 64, 128>}, {pipeline_mode = #tpu.pipeline_mode<synchronous>, transform_indices = @transform_6, window_bounds = array<i64: 1, 128>}, {transform_indices = @transform_7, window_bounds = array<i64: 8, 128>}]} {
    %c0 = arith.constant 0 : index
    %c0_0 = arith.constant 0 : index
    %0 = vector.load %arg1[%c0, %c0_0] : memref<8x32xbf16, #tpu.memory_space<vmem>>, vector<8x32xbf16>
    %c0_1 = arith.constant 0 : index
    %c0_2 = arith.constant 0 : index
    %1 = vector.load %arg2[%c0_1, %c0_2] : memref<32x128xbf16, #tpu.memory_space<vmem>>, vector<32x128xbf16>
    %cst = arith.constant dense<0.000000e+00> : vector<8x128xf32>
    %2 = tpu.matmul %0, %1, %cst {dimension_numbers = #tpu.dot_dimension_numbers<[1], [0], [0], [1], [0, 0, 1, 1], [], []>} : vector<8x32xbf16>, vector<32x128xbf16>, vector<8x128xf32> -> vector<8x128xf32>
    %c0_3 = arith.constant 0 : index
    %c0_4 = arith.constant 0 : index
    %3 = vector.load %arg3[%c0_3, %c0_4] : memref<1x128xf32, #tpu.memory_space<vmem>>, vector<1x128xf32>
    %4 = vector.broadcast %3 : vector<1x128xf32> to vector<8x128xf32>
    %5 = arith.addf %2, %4 : vector<8x128xf32>
    %cst_5 = arith.constant 0.000000e+00 : f32
    %6 = vector.broadcast %cst_5 : f32 to vector<8x128xf32>
    %7 = arith.maximumf %5, %6 : vector<8x128xf32>
    %8 = arith.truncf %7 : vector<8x128xf32> to vector<8x128xbf16>
    %c0_6 = arith.constant 0 : index
    %c0_7 = arith.constant 0 : index
    %9 = vector.load %arg4[%c0_6, %c0_7] : memref<128x64xbf16, #tpu.memory_space<vmem>>, vector<128x64xbf16>
    %cst_8 = arith.constant dense<0.000000e+00> : vector<8x64xf32>
    %10 = tpu.matmul %8, %9, %cst_8 {dimension_numbers = #tpu.dot_dimension_numbers<[1], [0], [0], [1], [0, 0, 1, 1], [], []>} : vector<8x128xbf16>, vector<128x64xbf16>, vector<8x64xf32> -> vector<8x64xf32>
    %c0_9 = arith.constant 0 : index
    %c0_10 = arith.constant 0 : index
    %11 = vector.load %arg5[%c0_9, %c0_10] : memref<1x64xf32, #tpu.memory_space<vmem>>, vector<1x64xf32>
    %12 = vector.broadcast %11 : vector<1x64xf32> to vector<8x64xf32>
    %13 = arith.addf %10, %12 : vector<8x64xf32>
    %cst_11 = arith.constant 0.000000e+00 : f32
    %14 = vector.broadcast %cst_11 : f32 to vector<8x64xf32>
    %15 = arith.maximumf %13, %14 : vector<8x64xf32>
    %16 = arith.truncf %15 : vector<8x64xf32> to vector<8x64xbf16>
    %c0_12 = arith.constant 0 : index
    %c0_13 = arith.constant 0 : index
    %17 = vector.load %arg6[%c0_12, %c0_13] : memref<64x128xbf16, #tpu.memory_space<vmem>>, vector<64x128xbf16>
    %cst_14 = arith.constant dense<0.000000e+00> : vector<8x128xf32>
    %18 = tpu.matmul %16, %17, %cst_14 {dimension_numbers = #tpu.dot_dimension_numbers<[1], [0], [0], [1], [0, 0, 1, 1], [], []>} : vector<8x64xbf16>, vector<64x128xbf16>, vector<8x128xf32> -> vector<8x128xf32>
    %c0_15 = arith.constant 0 : index
    %c0_16 = arith.constant 0 : index
    %19 = vector.load %arg7[%c0_15, %c0_16] : memref<1x128xf32, #tpu.memory_space<vmem>>, vector<1x128xf32>
    %20 = vector.broadcast %19 : vector<1x128xf32> to vector<8x128xf32>
    %21 = arith.addf %18, %20 : vector<8x128xf32>
    %c0_17 = arith.constant 0 : index
    %c0_18 = arith.constant 0 : index
    %22 = vector.load %arg8[%c0_17, %c0_18] : memref<8x128xf32, #tpu.memory_space<vmem>>, vector<8x128xf32>
    tpu.vector_store %arg8[%c0_17, %c0_18], %21 {strides = array<i32>} : memref<8x128xf32, #tpu.memory_space<vmem>>, vector<8x128xf32>,
    return
  }
  func.func @transform_0(%arg0: i32) -> (i32, i32) {
    %c0_i32 = arith.constant 0 : i32
    %c0_i32_0 = arith.constant 0 : i32
    return %arg0, %c0_i32 : i32, i32
  }
  func.func @transform_1(%arg0: i32) -> (i32, i32) {
    %c0_i32 = arith.constant 0 : i32
    %c0_i32_0 = arith.constant 0 : i32
    %c0_i32_1 = arith.constant 0 : i32
    return %c0_i32, %c0_i32_0 : i32, i32
  }
  func.func @transform_2(%arg0: i32) -> (i32, i32) {
    %c0_i32 = arith.constant 0 : i32
    %c0_i32_0 = arith.constant 0 : i32
    %c0_i32_1 = arith.constant 0 : i32
    return %c0_i32, %c0_i32_0 : i32, i32
  }
  func.func @transform_3(%arg0: i32) -> (i32, i32) {
    %c0_i32 = arith.constant 0 : i32
    %c0_i32_0 = arith.constant 0 : i32
    %c0_i32_1 = arith.constant 0 : i32
    return %c0_i32, %c0_i32_0 : i32, i32
  }
  func.func @transform_4(%arg0: i32) -> (i32, i32) {
    %c0_i32 = arith.constant 0 : i32
    %c0_i32_0 = arith.constant 0 : i32
    %c0_i32_1 = arith.constant 0 : i32
    return %c0_i32, %c0_i32_0 : i32, i32
  }
  func.func @transform_5(%arg0: i32) -> (i32, i32) {
    %c0_i32 = arith.constant 0 : i32
    %c0_i32_0 = arith.constant 0 : i32
    %c0_i32_1 = arith.constant 0 : i32
    return %c0_i32, %c0_i32_0 : i32, i32
  }
  func.func @transform_6(%arg0: i32) -> (i32, i32) {
    %c0_i32 = arith.constant 0 : i32
    %c0_i32_0 = arith.constant 0 : i32
    %c0_i32_1 = arith.constant 0 : i32
    return %c0_i32, %c0_i32_0 : i32, i32
  }
  func.func @transform_7(%arg0: i32) -> (i32, i32) {
    %c0_i32 = arith.constant 0 : i32
    %c0_i32_0 = arith.constant 0 : i32
    return %arg0, %c0_i32 : i32, i32
  }
}

</mosaic_0001>

<llo_original>
// kernel: parkinsons_net_forward.1
$region0: #{parkinsons_net_forward.1}
  #allocation0 [shape = 'u32[]', space=smem, size = 0x4, offset = 0x4, fixed_abs, tag = 'smem constant byte address 0x4 - core index']
  #allocation1 [shape = 'u32[144,128]{1,0:T(1,128)}', space=vmem, size = 0x12000, scoped, tag = 'internal scratch']
  %s0 = inlined_call_operand.vmem [shape: bf16[8,32], index: 0, kind: input, shape index: {}]
  %s1 = inlined_call_operand.vmem [shape: bf16[32,128], index: 1, kind: input, shape index: {}]
  %s2 = inlined_call_operand.vmem [shape: f32[1,128], index: 2, kind: input, shape index: {}]
  %s3 = inlined_call_operand.vmem [shape: bf16[128,64], index: 3, kind: input, shape index: {}]
  %s4 = inlined_call_operand.vmem [shape: f32[1,64], index: 4, kind: input, shape index: {}]
  %s5 = inlined_call_operand.vmem [shape: bf16[64,128], index: 5, kind: input, shape index: {}]
  %s6 = inlined_call_operand.vmem [shape: f32[1,128], index: 6, kind: input, shape index: {}]
  %s7 = inlined_call_operand.vmem [shape: f32[8,128], index: 7, kind: output, shape index: {}]
  %s8 = sld [smem:[#allocation0]]
  $region38: #{parkinsons_net_forward.1} parent=0
    _
  %s10 = ssub.s32 1, %s8
  %s11 = scalar_select 0, %s10, %s8
  // Predicated region
  $region2: #{parkinsons_net_forward.1} parent=0 // pred_check
    _
  $region3: #{parkinsons_net_forward.1} parent=0 // pred_check_branch
    %13 = sbr.rel (0) target = $region5
  $region4: #{parkinsons_net_forward.1} parent=0 // pred_region
    _
  $region5: #{parkinsons_net_forward.1} parent=0 // pred_fallthru
    _
  // Predicated region
  $region6: #{parkinsons_net_forward.1} parent=0 // pred_check
    _
  $region7: #{parkinsons_net_forward.1} parent=0 // pred_check_branch
    %15 = sbr.rel (0) target = $region9
  $region8: #{parkinsons_net_forward.1} parent=0 // pred_region
    _
  $region9: #{parkinsons_net_forward.1} parent=0 // pred_fallthru
    _
  // Predicated region
  $region10: #{parkinsons_net_forward.1} parent=0 // pred_check
    _
  $region11: #{parkinsons_net_forward.1} parent=0 // pred_check_branch
    %17 = sbr.rel (0) target = $region13
  $region12: #{parkinsons_net_forward.1} parent=0 // pred_region
    _
  $region13: #{parkinsons_net_forward.1} parent=0 // pred_fallthru
    _
  // Predicated region
  $region14: #{parkinsons_net_forward.1} parent=0 // pred_check
    _
  $region15: #{parkinsons_net_forward.1} parent=0 // pred_check_branch
    %19 = sbr.rel (0) target = $region17
  $region16: #{parkinsons_net_forward.1} parent=0 // pred_region
    _
  $region17: #{parkinsons_net_forward.1} parent=0 // pred_fallthru
    _
  // Predicated region
  $region18: #{parkinsons_net_forward.1} parent=0 // pred_check
    _
  $region19: #{parkinsons_net_forward.1} parent=0 // pred_check_branch
    %21 = sbr.rel (0) target = $region21
  $region20: #{parkinsons_net_forward.1} parent=0 // pred_region
    _
  $region21: #{parkinsons_net_forward.1} parent=0 // pred_fallthru
    _
  // Predicated region
  $region22: #{parkinsons_net_forward.1} parent=0 // pred_check
    _
  $region23: #{parkinsons_net_forward.1} parent=0 // pred_check_branch
    %23 = sbr.rel (0) target = $region25
  $region24: #{parkinsons_net_forward.1} parent=0 // pred_region
    _
  $region25: #{parkinsons_net_forward.1} parent=0 // pred_fallthru
    _
  // Predicated region
  $region26: #{parkinsons_net_forward.1} parent=0 // pred_check
    _
  $region27: #{parkinsons_net_forward.1} parent=0 // pred_check_branch
    %25 = sbr.rel (0) target = $region29
  $region28: #{parkinsons_net_forward.1} parent=0 // pred_region
    _
  $region29: #{parkinsons_net_forward.1} parent=0 // pred_fallthru
    _
  %v27 = vld [vmem:[%s0] sm:$0xf]
  %v28 = vld [vmem:[%s1] sm:$0xf]
  %v29 = vld [vmem:[%s1 + $0x4] sm:$0xf]
  %v30 = vld [vmem:[%s1 + $0x8] sm:$0xf]
  %v31 = vld [vmem:[%s1 + $0xc] sm:$0xf]
  %v32 = vld [vmem:[%s2] sm:$0x1]
  %v34 = vlaneseq
  %v35 = vshrl.u32 %v34, 7
  %v36 = vsub.s32 0, %v35
  %v37 = vrot.slane %v32, %v36
  %v43 = vunpack.c.l.b16 %v28
  %v44 = vunpack.c.l.b16 %v29
  %v45 = vunpack.c.l.b16 %v30
  %v46 = vunpack.c.l.b16 %v31
  %v47 = vpack.c.b16 %v44, %v43
  %v48 = vpack.c.b16 %v46, %v45
  %vm51 = vcmask 261120
  %v53 = vsel %vm51, %v27, 0
  %55 = vmatprep.subr.bf16.mxu0 0
  %56 = vmatpush1.bf16.msra.mxu0 %v47
  %57 = vmatprep.subr.bf16.mxu0 0
  %58 = vmatpush1.bf16.msra.mxu0 %v48
  %59 = vmatprep.subr.bf16.mxu0 0
  %60 = vmatpush1.bf16.msra.mxu0 0
  %61 = vmatprep.subr.bf16.mxu0 0
  %62 = vmatpush1.bf16.msra.mxu0 0
  %63 = vmatprep.subr.bf16.mxu0 0
  %64 = vmatpush1.bf16.msra.mxu0 0
  %65 = vmatprep.subr.bf16.mxu0 0
  %66 = vmatpush1.bf16.msra.mxu0 0
  %67 = vmatprep.subr.bf16.mxu0 0
  %68 = vmatpush1.bf16.msra.mxu0 0
  %69 = vmatprep.subr.bf16.mxu0 0
  %70 = vmatpush1.bf16.msra.mxu0 0
  %71 = vmatprep.subr.bf16.mxu0 0
  %72 = vmatpush1.bf16.msra.mxu0 0
  %73 = vmatprep.subr.bf16.mxu0 0
  %74 = vmatpush1.bf16.msra.mxu0 0
  %75 = vmatprep.subr.bf16.mxu0 0
  %76 = vmatpush1.bf16.msra.mxu0 0
  %77 = vmatprep.subr.bf16.mxu0 0
  %78 = vmatpush1.bf16.msra.mxu0 0
  %79 = vmatprep.subr.bf16.mxu0 0
  %80 = vmatpush1.bf16.msra.mxu0 0
  %81 = vmatprep.subr.bf16.mxu0 0
  %82 = vmatpush1.bf16.msra.mxu0 0
  %83 = vmatprep.subr.bf16.mxu0 0
  %84 = vmatpush1.bf16.msra.mxu0 0
  %85 = vmatprep.subr.bf16.mxu0 0
  %86 = vmatpush1.bf16.msra.mxu0 0
  %87 = vmatprep.mubr.bf16.mxu0 0
  %88 = vmatmul.mubr.bf16.gmra.mrb[0].mxu0 %v53
  %v89 = vpop.f32.mrb[0].mxu0
  %v90 = vadd.f32 %v37, %v89
  %v91 = vpop.f32.mrb[0].mxu0
  %v92 = vpop.f32.mrb[0].mxu0
  %v93 = vpop.f32.mrb[0].mxu0
  %94 = vdwg.mxu0
  %v95 = vmax.f32 %v90, 0.0
  %v96 = vpack.c.bf16 %v95, %v95
  %v97 = vld [vmem:[%s3] sm:$0xf]
  %v98 = vld [vmem:[%s3 + $0x4] sm:$0xf]
  %v99 = vld [vmem:[%s3 + $0x8] sm:$0xf]
  %v100 = vld [vmem:[%s3 + $0xc] sm:$0xf]
  %v101 = vld [vmem:[%s3 + $0x10] sm:$0xf]
  %v102 = vld [vmem:[%s3 + $0x14] sm:$0xf]
  %v103 = vld [vmem:[%s3 + $0x18] sm:$0xf]
  %v104 = vld [vmem:[%s3 + $0x1c] sm:$0xf]
  %v105 = vld [vmem:[%s3 + $0x20] sm:$0xf]
  %v106 = vld [vmem:[%s3 + $0x24] sm:$0xf]
  %v107 = vld [vmem:[%s3 + $0x28] sm:$0xf]
  %v108 = vld [vmem:[%s3 + $0x2c] sm:$0xf]
  %v109 = vld [vmem:[%s3 + $0x30] sm:$0xf]
  %v110 = vld [vmem:[%s3 + $0x34] sm:$0xf]
  %v111 = vld [vmem:[%s3 + $0x38] sm:$0xf]
  %v112 = vld [vmem:[%s3 + $0x3c] sm:$0xf]
  %v113 = vld [vmem:[%s4] sm:$0x1]
  %v115 = vlaneseq
  %v116 = vshrl.u32 %v115, 7
  %v117 = vsub.s32 0, %v116
  %v118 = vrot.slane %v113, %v117
  %v136 = vunpack.c.l.b16 %v97
  %v137 = vunpack.c.l.b16 %v98
  %v138 = vunpack.c.l.b16 %v99
  %v139 = vunpack.c.l.b16 %v100
  %v140 = vunpack.c.l.b16 %v101
  %v141 = vunpack.c.l.b16 %v102
  %v142 = vunpack.c.l.b16 %v103
  %v143 = vunpack.c.l.b16 %v104
  %v144 = vunpack.c.l.b16 %v105
  %v145 = vunpack.c.l.b16 %v106
  %v146 = vunpack.c.l.b16 %v107
  %v147 = vunpack.c.l.b16 %v108
  %v148 = vunpack.c.l.b16 %v109
  %v149 = vunpack.c.l.b16 %v110
  %v150 = vunpack.c.l.b16 %v111
  %v151 = vunpack.c.l.b16 %v112
  %v152 = vpack.c.b16 %v137, %v136
  %v153 = vpack.c.b16 %v139, %v138
  %v154 = vpack.c.b16 %v141, %v140
  %v155 = vpack.c.b16 %v143, %v142
  %v156 = vpack.c.b16 %v145, %v144
  %v157 = vpack.c.b16 %v147, %v146
  %v158 = vpack.c.b16 %v149, %v148
  %v159 = vpack.c.b16 %v151, %v150
  %168 = vmatprep.subr.bf16.mxu0 0
  %169 = vmatpush1.bf16.msra.mxu0 %v152
  %170 = vmatprep.subr.bf16.mxu0 0
  %171 = vmatpush1.bf16.msra.mxu0 %v153
  %172 = vmatprep.subr.bf16.mxu0 0
  %173 = vmatpush1.bf16.msra.mxu0 %v154
  %174 = vmatprep.subr.bf16.mxu0 0
  %175 = vmatpush1.bf16.msra.mxu0 %v155
  %176 = vmatprep.subr.bf16.mxu0 0
  %177 = vmatpush1.bf16.msra.mxu0 %v156
  %178 = vmatprep.subr.bf16.mxu0 0
  %179 = vmatpush1.bf16.msra.mxu0 %v157
  %180 = vmatprep.subr.bf16.mxu0 0
  %181 = vmatpush1.bf16.msra.mxu0 %v158
  %182 = vmatprep.subr.bf16.mxu0 0
  %183 = vmatpush1.bf16.msra.mxu0 %v159
  %184 = vmatprep.subr.bf16.mxu0 0
  %185 = vmatpush1.bf16.msra.mxu0 0
  %186 = vmatprep.subr.bf16.mxu0 0
  %187 = vmatpush1.bf16.msra.mxu0 0
  %188 = vmatprep.subr.bf16.mxu0 0
  %189 = vmatpush1.bf16.msra.mxu0 0
  %190 = vmatprep.subr.bf16.mxu0 0
  %191 = vmatpush1.bf16.msra.mxu0 0
  %192 = vmatprep.subr.bf16.mxu0 0
  %193 = vmatpush1.bf16.msra.mxu0 0
  %194 = vmatprep.subr.bf16.mxu0 0
  %195 = vmatpush1.bf16.msra.mxu0 0
  %196 = vmatprep.subr.bf16.mxu0 0
  %197 = vmatpush1.bf16.msra.mxu0 0
  %198 = vmatprep.subr.bf16.mxu0 0
  %199 = vmatpush1.bf16.msra.mxu0 0
  %200 = vmatprep.mubr.bf16.mxu0 0
  %201 = vmatmul.mubr.bf16.gmra.mrb[0].mxu0 %v96
  %v202 = vpop.f32.mrb[0].mxu0
  %v203 = vadd.f32 %v118, %v202
  %v204 = vpop.f32.mrb[0].mxu0
  %v205 = vpop.f32.mrb[0].mxu0
  %v206 = vpop.f32.mrb[0].mxu0
  %207 = vdwg.mxu0
  %v208 = vmax.f32 %v203, 0.0
  %v209 = vpack.c.bf16 %v208, %v208
  %v210 = vld [vmem:[%s5] sm:$0xf]
  %v211 = vld [vmem:[%s5 + $0x4] sm:$0xf]
  %v212 = vld [vmem:[%s5 + $0x8] sm:$0xf]
  %v213 = vld [vmem:[%s5 + $0xc] sm:$0xf]
  %v214 = vld [vmem:[%s5 + $0x10] sm:$0xf]
  %v215 = vld [vmem:[%s5 + $0x14] sm:$0xf]
  %v216 = vld [vmem:[%s5 + $0x18] sm:$0xf]
  %v217 = vld [vmem:[%s5 + $0x1c] sm:$0xf]
  %v218 = vld [vmem:[%s6] sm:$0x1]
  %v220 = vlaneseq
  %v221 = vshrl.u32 %v220, 7
  %v222 = vsub.s32 0, %v221
  %v223 = vrot.slane %v218, %v222
  %v233 = vunpack.c.l.b16 %v210
  %v234 = vunpack.c.l.b16 %v211
  %v235 = vunpack.c.l.b16 %v212
  %v236 = vunpack.c.l.b16 %v213
  %v237 = vunpack.c.l.b16 %v214
  %v238 = vunpack.c.l.b16 %v215
  %v239 = vunpack.c.l.b16 %v216
  %v240 = vunpack.c.l.b16 %v217
  %v241 = vpack.c.b16 %v234, %v233
  %v242 = vpack.c.b16 %v236, %v235
  %v243 = vpack.c.b16 %v238, %v237
  %v244 = vpack.c.b16 %v240, %v239
  %vm249 = vcmask 523264
  %v251 = vsel %vm249, %v209, 0
  %253 = vmatprep.subr.bf16.mxu0 0
  %254 = vmatpush1.bf16.msra.mxu0 %v241
  %255 = vmatprep.subr.bf16.mxu0 0
  %256 = vmatpush1.bf16.msra.mxu0 %v242
  %257 = vmatprep.subr.bf16.mxu0 0
  %258 = vmatpush1.bf16.msra.mxu0 %v243
  %259 = vmatprep.subr.bf16.mxu0 0
  %260 = vmatpush1.bf16.msra.mxu0 %v244
  %261 = vmatprep.subr.bf16.mxu0 0
  %262 = vmatpush1.bf16.msra.mxu0 0
  %263 = vmatprep.subr.bf16.mxu0 0
  %264 = vmatpush1.bf16.msra.mxu0 0
  %265 = vmatprep.subr.bf16.mxu0 0
  %266 = vmatpush1.bf16.msra.mxu0 0
  %267 = vmatprep.subr.bf16.mxu0 0
  %268 = vmatpush1.bf16.msra.mxu0 0
  %269 = vmatprep.subr.bf16.mxu0 0
  %270 = vmatpush1.bf16.msra.mxu0 0
  %271 = vmatprep.subr.bf16.mxu0 0
  %272 = vmatpush1.bf16.msra.mxu0 0
  %273 = vmatprep.subr.bf16.mxu0 0
  %274 = vmatpush1.bf16.msra.mxu0 0
  %275 = vmatprep.subr.bf16.mxu0 0
  %276 = vmatpush1.bf16.msra.mxu0 0
  %277 = vmatprep.subr.bf16.mxu0 0
  %278 = vmatpush1.bf16.msra.mxu0 0
  %279 = vmatprep.subr.bf16.mxu0 0
  %280 = vmatpush1.bf16.msra.mxu0 0
  %281 = vmatprep.subr.bf16.mxu0 0
  %282 = vmatpush1.bf16.msra.mxu0 0
  %283 = vmatprep.subr.bf16.mxu0 0
  %284 = vmatpush1.bf16.msra.mxu0 0
  %285 = vmatprep.mubr.bf16.mxu0 0
  %286 = vmatmul.mubr.bf16.gmra.mrb[0].mxu0 %v251
  %v287 = vpop.f32.mrb[0].mxu0
  %v288 = vadd.f32 %v223, %v287
  %v289 = vpop.f32.mrb[0].mxu0
  %v290 = vpop.f32.mrb[0].mxu0
  %v291 = vpop.f32.mrb[0].mxu0
  %292 = vdwg.mxu0
  %293 = vst [vmem:[%s7] sm:$0xff] %v288
  // Predicated region
  $region30: #{parkinsons_net_forward.1} parent=0 // pred_check
    _
  $region31: #{parkinsons_net_forward.1} parent=0 // pred_check_branch
    %295 = sbr.rel (0) target = $region33
  $region32: #{parkinsons_net_forward.1} parent=0 // pred_region
    _
  $region33: #{parkinsons_net_forward.1} parent=0 // pred_fallthru
    _
  // Predicated region
  $region34: #{parkinsons_net_forward.1} parent=0 // pred_check
    _
  $region35: #{parkinsons_net_forward.1} parent=0 // pred_check_branch
    %297 = sbr.rel (0) target = $region37
  $region36: #{parkinsons_net_forward.1} parent=0 // pred_region
    _
  $region37: #{parkinsons_net_forward.1} parent=0 // pred_fallthru
    _

</llo_original>
